<compile_context>
chip_gen: v7x
topology: tpu7x:2x2x1
jax: 0.10.0
libtpu: 0.0.40
codegen_flags: <defaults>
</compile_context>

<pallas_src>
import functools

import jax
import jax.numpy as jnp
from jax.experimental import pallas as pl
from jax.experimental.pallas import tpu as pltpu

# ------------------------- config (small synthetic BERT) ---------------------
VOCAB = 128
HIDDEN = 768
N_LAYERS = 2          # TODO(synk): bert-base-chinese has 12 layers; reduced for the small synthetic example
N_HEADS = 12
HEAD_DIM = HIDDEN // N_HEADS      # 64
INTERMEDIATE = 3072
MAX_POS = 32
N_CLASSES = 5
CLS_PAD = 128                     # lane-dense padded classifier width
LN_EPS = 1e-12
DROPOUT_P = 0.5
VMEM_LIMIT = 48 * 1024 * 1024     # <=48 MiB keeps headroom on v7x (64 MiB phys)


# ------------------------------- kernels -------------------------------------
def _apply_activation(y, activation):
    if activation == "gelu":
        return jax.nn.gelu(y, approximate=False)     # BERT uses erf-gelu
    if activation == "tanh":
        return jnp.tanh(y)
    if activation == "relu":
        return jnp.maximum(y, 0.0)
    return y


def dense_kernel(x_ref, w_ref, b_ref, o_ref, *, activation):
    """Full-K matmul + bias + optional activation; single store, bf16 out."""
    y = jnp.dot(x_ref[...], w_ref[...],
                preferred_element_type=jnp.float32) + b_ref[...]
    o_ref[...] = _apply_activation(y, activation).astype(o_ref.dtype)


def dense_ln_kernel(x_ref, w_ref, b_ref, res_ref, g_ref, beta_ref, o_ref):
    """Full-K matmul + bias + residual add + LayerNorm fused epilogue.

    Requires tn == N (full hidden row resident) so the LN stats are exact.
    """
    y = jnp.dot(x_ref[...], w_ref[...],
                preferred_element_type=jnp.float32) + b_ref[...]
    h = y + res_ref[...].astype(jnp.float32)
    mu = jnp.mean(h, axis=-1, keepdims=True)
    var = jnp.mean((h - mu) * (h - mu), axis=-1, keepdims=True)
    o_ref[...] = ((h - mu) * jax.lax.rsqrt(var + LN_EPS)
                  * g_ref[...] + beta_ref[...]).astype(o_ref.dtype)


def ln_kernel(x_ref, g_ref, b_ref, o_ref):
    """Plain LayerNorm (embedding LN)."""
    x = x_ref[...].astype(jnp.float32)
    mu = jnp.mean(x, axis=-1, keepdims=True)
    var = jnp.mean((x - mu) * (x - mu), axis=-1, keepdims=True)
    o_ref[...] = ((x - mu) * jax.lax.rsqrt(var + LN_EPS)
                  * g_ref[...] + b_ref[...]).astype(o_ref.dtype)


def attn_kernel(qkv_ref, bias_ref, o_ref, *, scale, n_heads, head_dim, hidden):
    """One batch element: softmax(QK^T*scale + bias) V for all heads.

    Reads the fused QKV projection output in place (per-head static lane
    slices, no head-split transposes) and writes a lane-dense (S, 768) block.
    """
    # TODO(synk): for production S (e.g. 512) switch to a KV-chunked
    # flash-style online-softmax loop to stay inside v7x's 64 MiB VMEM.
    qkv = qkv_ref[0]            # (S, 3*hidden) bf16
    bias = bias_ref[0]          # (1, S) additive mask bias, f32

    ctx = []
    for h in range(n_heads):
        lo = h * head_dim
        qh = qkv[:, lo:lo + head_dim]                            # (S, Dh)
        kh = qkv[:, hidden + lo:hidden + lo + head_dim]          # (S, Dh)
        vh = qkv[:, 2 * hidden + lo:2 * hidden + lo + head_dim]  # (S, Dh)

        s = jax.lax.dot_general(qh, kh, (((1,), (1,)), ((), ())),
                                preferred_element_type=jnp.float32) * scale
        s = s + bias                                   # (S, S) + (1, S)
        s = s - jnp.max(s, axis=-1, keepdims=True)
        p = jnp.exp(s)
        p = p * pl.reciprocal(jnp.sum(p, axis=-1, keepdims=True), approx=True)
        ctx.append(jnp.dot(p.astype(jnp.bfloat16), vh,
                           preferred_element_type=jnp.float32))   # (S, Dh)

    # single lane-dense (S, hidden) store
    o_ref[0] = jnp.concatenate(ctx, axis=-1).astype(o_ref.dtype)


def tail_kernel(cls_ref, keep_ref, pw_ref, pb_ref, cw_ref, cb_ref, o_ref):
    """Pooler dense+tanh -> dropout mask -> Linear(768,128-padded) -> ReLU."""
    pooled = jnp.tanh(jnp.dot(cls_ref[...], pw_ref[...],
                              preferred_element_type=jnp.float32) + pb_ref[...])
    x = (pooled * keep_ref[...]).astype(jnp.bfloat16)
    y = jnp.dot(x, cw_ref[...], preferred_element_type=jnp.float32) + cb_ref[...]
    o_ref[...] = jnp.maximum(y, 0.0)


# ------------------------------ wrappers --------------------------------------
def _mosaic_params(*sem):
    return pltpu.CompilerParams(dimension_semantics=sem,
                                vmem_limit_bytes=VMEM_LIMIT)


def _pick_m_tile(m):
    """Largest M tile that still gives >=2 grid steps (keeps both v7x TCs busy
    on the fused-LN calls whose N axis degenerates to one block)."""
    for t in (256, 128, 64, 32, 16, 8):
        if m % t == 0 and m // t >= 2:
            return t
    return m


def _pick_n_tile(n):
    """Largest 256-multiple tile dividing N (v6e/v7x MXU is 2x256x256)."""
    for t in (768, 512, 256, 128):
        if n % t == 0:
            return t
    return n


def dense(x, w, b, activation="none", residual=None, ln_gamma=None, ln_beta=None):
    """y = act(x @ w + b); optionally fused with residual-add + LayerNorm.

    Full-K blocks (K<=3072 fits in VMEM), bf16 output.
    """
    M, K = x.shape
    N = w.shape[1]
    fuse_ln = residual is not None
    if fuse_ln:
        assert activation == "none"   # BERT applies LN on the raw projection+residual

    tm = _pick_m_tile(M)
    tn = N if fuse_ln else _pick_n_tile(N)   # LN needs the whole row resident
    grid = (M // tm, N // tn)

    in_specs = [
        pl.BlockSpec((tm, K), lambda i, j: (i, 0)),
        pl.BlockSpec((K, tn), lambda i, j: (0, j)),
        pl.BlockSpec((1, tn), lambda i, j: (0, j)),
    ]
    args = [x, w, b.reshape(1, N)]

    if fuse_ln:
        in_specs += [
            pl.BlockSpec((tm, tn), lambda i, j: (i, j)),
            pl.BlockSpec((1, tn), lambda i, j: (0, j)),
            pl.BlockSpec((1, tn), lambda i, j: (0, j)),
        ]
        args += [residual, ln_gamma.reshape(1, N), ln_beta.reshape(1, N)]
        kernel = dense_ln_kernel
    else:
        kernel = functools.partial(dense_kernel, activation=activation)

    return pl.pallas_call(
        kernel,
        out_shape=jax.ShapeDtypeStruct((M, N), jnp.bfloat16),
        grid=grid,
        in_specs=in_specs,
        out_specs=pl.BlockSpec((tm, tn), lambda i, j: (i, j)),
        compiler_params=_mosaic_params("parallel", "parallel"),
    )(*args)


def layernorm(x, gamma, beta):
    M, H = x.shape
    tm = _pick_m_tile(M)
    return pl.pallas_call(
        ln_kernel,
        out_shape=jax.ShapeDtypeStruct((M, H), jnp.bfloat16),
        grid=(M // tm,),
        in_specs=[pl.BlockSpec((tm, H), lambda i: (i, 0)),
                  pl.BlockSpec((1, H), lambda i: (0, 0)),
                  pl.BlockSpec((1, H), lambda i: (0, 0))],
        out_specs=pl.BlockSpec((tm, H), lambda i: (i, 0)),
        compiler_params=_mosaic_params("parallel"),
    )(x, gamma.reshape(1, H), beta.reshape(1, H))


def attention(qkv, bias3, B, S):
    """qkv: (B*S, 3*HIDDEN) bf16 fused-QKV output (read in place);
    bias3: (B, 1, S) f32 additive mask bias. Returns (B*S, HIDDEN) bf16."""
    qkv = qkv.reshape(B, S, 3 * HIDDEN)      # free contiguous view
    kernel = functools.partial(attn_kernel,
                               scale=1.0 / float(HEAD_DIM) ** 0.5,
                               n_heads=N_HEADS, head_dim=HEAD_DIM, hidden=HIDDEN)
    out = pl.pallas_call(
        kernel,
        out_shape=jax.ShapeDtypeStruct((B, S, HIDDEN), jnp.bfloat16),
        grid=(B,),
        in_specs=[pl.BlockSpec((1, S, 3 * HIDDEN), lambda b: (b, 0, 0)),
                  pl.BlockSpec((1, 1, S), lambda b: (b, 0, 0))],
        out_specs=pl.BlockSpec((1, S, HIDDEN), lambda b: (b, 0, 0)),
        compiler_params=_mosaic_params("parallel"),
    )(qkv, bias3)
    return out.reshape(B * S, HIDDEN)        # free contiguous view


def classifier_tail(cls_tok, keep_mask, pool_w, pool_b, cls_w_pad, cls_b_pad):
    """Fused pooler + dropout + classifier head; output padded to 128 lanes."""
    B, K = cls_tok.shape
    Np = cls_w_pad.shape[1]
    return pl.pallas_call(
        tail_kernel,
        out_shape=jax.ShapeDtypeStruct((B, Np), jnp.float32),
        grid=(1,),
        in_specs=[pl.BlockSpec((B, K), lambda i: (0, 0)),
                  pl.BlockSpec((B, K), lambda i: (0, 0)),
                  pl.BlockSpec((K, K), lambda i: (0, 0)),
                  pl.BlockSpec((1, K), lambda i: (0, 0)),
                  pl.BlockSpec((K, Np), lambda i: (0, 0)),
                  pl.BlockSpec((1, Np), lambda i: (0, 0))],
        out_specs=pl.BlockSpec((B, Np), lambda i: (0, 0)),
        compiler_params=_mosaic_params("arbitrary"),
    )(cls_tok, keep_mask, pool_w, pool_b.reshape(1, K),
      cls_w_pad, cls_b_pad.reshape(1, Np))


# ------------------------------ model glue ------------------------------------
def encoder_layer(h, bias3, lp, B, S):
    # h: (B*S, HIDDEN) bf16
    qkv = dense(h, lp["wqkv"], lp["bqkv"])                 # fused QKV: (B*S, 2304)
    ctx = attention(qkv, bias3, B, S)                      # (B*S, HIDDEN) lane-dense

    # attention output projection + residual + LayerNorm fused in one kernel
    h = dense(ctx, lp["wo"], lp["bo"], residual=h,
              ln_gamma=lp["ln1_g"], ln_beta=lp["ln1_b"])

    # FFN: up-projection with erf-GELU, then down-projection + residual + LN
    ffn = dense(h, lp["w1"], lp["b1"], activation="gelu")
    h = dense(ffn, lp["w2"], lp["b2"], residual=h,
              ln_gamma=lp["ln2_g"], ln_beta=lp["ln2_b"])
    return h


def bert_classifier_forward(params, input_ids, attention_mask,
                            dropout_key, training=True):
    B, S = input_ids.shape
    # --- embeddings (gather is glue; LayerNorm runs in a Pallas kernel) ---
    emb = (params["word_emb"][input_ids]
           + params["pos_emb"][:S][None, :, :]
           + params["type_emb"][0][None, None, :])
    h = layernorm(emb.reshape(B * S, HIDDEN).astype(jnp.float32),
                  params["emb_ln_g"], params["emb_ln_b"])

    # HF-style extended attention mask bias, hoisted out of the attention kernel
    bias3 = (1.0 - attention_mask.astype(jnp.float32)).reshape(B, 1, S) * (-10000.0)

    for lp in params["layers"]:
        h = encoder_layer(h, bias3, lp, B, S)

    # --- pooler + dropout + Linear(768,5) + ReLU fused tail ---
    cls_tok = h.reshape(B, S, HIDDEN)[:, 0, :]             # (B, HIDDEN) bf16

    if training and DROPOUT_P > 0.0:
        keep = jax.random.bernoulli(dropout_key, 1.0 - DROPOUT_P, (B, HIDDEN))
        keep_mask = keep.astype(jnp.float32) / (1.0 - DROPOUT_P)   # inverted dropout
    else:
        keep_mask = jnp.ones((B, HIDDEN), jnp.float32)

    logits_pad = classifier_tail(cls_tok, keep_mask, params["pool_w"],
                                 params["pool_b"], params["cls_w_pad"],
                                 params["cls_b_pad"])
    return logits_pad[:, :N_CLASSES]


def init_params(key):
    keys = iter(jax.random.split(key, 16 + 8 * N_LAYERS))

    def nrm(shape, dtype=jnp.bfloat16):
        return (0.02 * jax.random.normal(next(keys), shape, jnp.float32)).astype(dtype)

    cls_w = nrm((HIDDEN, N_CLASSES))
    cls_w_pad = jnp.zeros((HIDDEN, CLS_PAD), jnp.bfloat16).at[:, :N_CLASSES].set(cls_w)

    params = {
        "word_emb": nrm((VOCAB, HIDDEN), jnp.float32),
        "pos_emb": nrm((MAX_POS, HIDDEN), jnp.float32),
        "type_emb": nrm((2, HIDDEN), jnp.float32),
        "emb_ln_g": jnp.ones((HIDDEN,), jnp.float32),
        "emb_ln_b": jnp.zeros((HIDDEN,), jnp.float32),
        "pool_w": nrm((HIDDEN, HIDDEN)),
        "pool_b": jnp.zeros((HIDDEN,), jnp.float32),
        "cls_w_pad": cls_w_pad,                       # lane-dense padded head
        "cls_b_pad": jnp.zeros((CLS_PAD,), jnp.float32),
        "layers": [],
    }
    for _ in range(N_LAYERS):
        wq, wk, wv = (nrm((HIDDEN, HIDDEN)) for _ in range(3))
        params["layers"].append({
            "wqkv": jnp.concatenate([wq, wk, wv], axis=1),      # (768, 2304) bf16
            "bqkv": jnp.zeros((3 * HIDDEN,), jnp.float32),
            "wo": nrm((HIDDEN, HIDDEN)),
            "bo": jnp.zeros((HIDDEN,), jnp.float32),
            "ln1_g": jnp.ones((HIDDEN,), jnp.float32),
            "ln1_b": jnp.zeros((HIDDEN,), jnp.float32),
            "w1": nrm((HIDDEN, INTERMEDIATE)),
            "b1": jnp.zeros((INTERMEDIATE,), jnp.float32),
            "w2": nrm((INTERMEDIATE, HIDDEN)),
            "b2": jnp.zeros((HIDDEN,), jnp.float32),
            "ln2_g": jnp.ones((HIDDEN,), jnp.float32),
            "ln2_b": jnp.zeros((HIDDEN,), jnp.float32),
        })
    return params


if __name__ == "__main__":
    key = jax.random.PRNGKey(0)
    pkey, ikey, dkey = jax.random.split(key, 3)

    params = init_params(pkey)

    B, S = 2, 8
    input_ids = jax.random.randint(ikey, (B, S), 0, VOCAB, dtype=jnp.int32)
    attention_mask = jnp.array([[1, 1, 1, 1, 1, 1, 1, 1],
                                [1, 1, 1, 1, 1, 1, 0, 0]], dtype=jnp.int32)

    logits = bert_classifier_forward(params, input_ids, attention_mask,
                                     dropout_key=dkey, training=True)
    logits = jax.block_until_ready(logits)

    assert logits.shape == (B, N_CLASSES), logits.shape
    assert bool(jnp.all(jnp.isfinite(logits)))
    assert bool(jnp.all(logits >= 0.0))      # ReLU output is non-negative

    print("KERNEL_OK")
</pallas_src>

<mosaic_0001>
module attributes {stable_mosaic.version = 11 : i64} {
  func.func @ln_kernel(%arg0: i32, %arg1: memref<8x768xf32, #tpu.memory_space<vmem>>, %arg2: memref<1x768xf32, #tpu.memory_space<vmem>>, %arg3: memref<1x768xf32, #tpu.memory_space<vmem>>, %arg4: memref<8x768xbf16, #tpu.memory_space<vmem>>) attributes {dimension_semantics = [#tpu.dimension_semantics<parallel>], iteration_bounds = array<i64: 2>, scalar_prefetch = 0 : i64, scratch_operands = 0 : i64, tpu.core_type = #tpu.core_type<tc>, window_params = [{transform_indices = @transform_0, window_bounds = array<i64: 8, 768>}, {pipeline_mode = #tpu.pipeline_mode<synchronous>, transform_indices = @transform_1, window_bounds = array<i64: 1, 768>}, {pipeline_mode = #tpu.pipeline_mode<synchronous>, transform_indices = @transform_2, window_bounds = array<i64: 1, 768>}, {transform_indices = @transform_3, window_bounds = array<i64: 8, 768>}]} {
    %c0 = arith.constant 0 : index
    %c0_0 = arith.constant 0 : index
    %0 = vector.load %arg1[%c0, %c0_0] : memref<8x768xf32, #tpu.memory_space<vmem>>, vector<8x768xf32>
    %cst = arith.constant dense<0.000000e+00> : vector<8xf32>
    %1 = vector.multi_reduction <add>, %0, %cst [1] : vector<8x768xf32> to vector<8xf32>
    %2 = vector.shape_cast %1 : vector<8xf32> to vector<8x1xf32>
    %cst_1 = arith.constant 7.680000e+02 : f32
    %3 = vector.broadcast %cst_1 : f32 to vector<8x1xf32>
    %4 = arith.divf %2, %3 : vector<8x1xf32>
    %5 = vector.broadcast %4 : vector<8x1xf32> to vector<8x768xf32>
    %6 = arith.subf %0, %5 : vector<8x768xf32>
    %7 = vector.broadcast %4 : vector<8x1xf32> to vector<8x768xf32>
    %8 = arith.subf %0, %7 : vector<8x768xf32>
    %9 = arith.mulf %6, %8 : vector<8x768xf32>
    %cst_2 = arith.constant dense<0.000000e+00> : vector<8xf32>
    %10 = vector.multi_reduction <add>, %9, %cst_2 [1] : vector<8x768xf32> to vector<8xf32>
    %11 = vector.shape_cast %10 : vector<8xf32> to vector<8x1xf32>
    %cst_3 = arith.constant 7.680000e+02 : f32
    %12 = vector.broadcast %cst_3 : f32 to vector<8x1xf32>
    %13 = arith.divf %11, %12 : vector<8x1xf32>
    %14 = vector.broadcast %4 : vector<8x1xf32> to vector<8x768xf32>
    %15 = arith.subf %0, %14 : vector<8x768xf32>
    %cst_4 = arith.constant 9.99999996E-13 : f32
    %16 = vector.broadcast %cst_4 : f32 to vector<8x1xf32>
    %17 = arith.addf %13, %16 : vector<8x1xf32>
    %18 = math.rsqrt %17 : vector<8x1xf32>
    %19 = vector.broadcast %18 : vector<8x1xf32> to vector<8x768xf32>
    %20 = arith.mulf %15, %19 : vector<8x768xf32>
    %c0_5 = arith.constant 0 : index
    %c0_6 = arith.constant 0 : index
    %21 = vector.load %arg2[%c0_5, %c0_6] : memref<1x768xf32, #tpu.memory_space<vmem>>, vector<1x768xf32>
    %22 = vector.broadcast %21 : vector<1x768xf32> to vector<8x768xf32>
    %23 = arith.mulf %20, %22 : vector<8x768xf32>
    %c0_7 = arith.constant 0 : index
    %c0_8 = arith.constant 0 : index
    %24 = vector.load %arg3[%c0_7, %c0_8] : memref<1x768xf32, #tpu.memory_space<vmem>>, vector<1x768xf32>
    %25 = vector.broadcast %24 : vector<1x768xf32> to vector<8x768xf32>
    %26 = arith.addf %23, %25 : vector<8x768xf32>
    %27 = arith.truncf %26 : vector<8x768xf32> to vector<8x768xbf16>
    %c0_9 = arith.constant 0 : index
    %c0_10 = arith.constant 0 : index
    %28 = vector.load %arg4[%c0_9, %c0_10] : memref<8x768xbf16, #tpu.memory_space<vmem>>, vector<8x768xbf16>
    tpu.vector_store %arg4[%c0_9, %c0_10], %27 {strides = array<i32>} : memref<8x768xbf16, #tpu.memory_space<vmem>>, vector<8x768xbf16>,
    return
  }
  func.func @transform_0(%arg0: i32) -> (i32, i32) {
    %c0_i32 = arith.constant 0 : i32
    %c0_i32_0 = arith.constant 0 : i32
    return %arg0, %c0_i32 : i32, i32
  }
  func.func @transform_1(%arg0: i32) -> (i32, i32) {
    %c0_i32 = arith.constant 0 : i32
    %c0_i32_0 = arith.constant 0 : i32
    %c0_i32_1 = arith.constant 0 : i32
    return %c0_i32, %c0_i32_0 : i32, i32
  }
  func.func @transform_2(%arg0: i32) -> (i32, i32) {
    %c0_i32 = arith.constant 0 : i32
    %c0_i32_0 = arith.constant 0 : i32
    %c0_i32_1 = arith.constant 0 : i32
    return %c0_i32, %c0_i32_0 : i32, i32
  }
  func.func @transform_3(%arg0: i32) -> (i32, i32) {
    %c0_i32 = arith.constant 0 : i32
    %c0_i32_0 = arith.constant 0 : i32
    return %arg0, %c0_i32 : i32, i32
  }
}

</mosaic_0001>

<llo_original>
// kernel: tpu_custom_call.1
$region0: #{tpu_custom_call.1}
  #allocation0 [shape = 'u32[]', space=smem, size = 0x4, offset = 0x4, fixed_abs, tag = 'smem constant byte address 0x4 - core index']
  #allocation1 [shape = 'u32[144,128]{1,0:T(1,128)}', space=vmem, size = 0x12000, scoped, tag = 'internal scratch']
  %s0 = inlined_call_operand.hbm [shape: f32[16,768], index: 0, kind: input, shape index: {}]
  %s1 = inlined_call_operand.hbm [shape: f32[1,768], index: 1, kind: input, shape index: {}]
  %s2 = inlined_call_operand.vmem [shape: f32[1,768], index: 2, kind: input, shape index: {}]
  %s3 = inlined_call_operand.hbm [shape: bf16[16,768], index: 3, kind: output, shape index: {}]
  %s4 = sld [smem:[#allocation0]]
  $region53: #{tpu_custom_call.1} parent=0
    _
  %s6 = ssub.s32 1, %s4
  %s7 = scalar_select 0, %s6, %s4
  $region1: #{tpu_custom_call.1} parent=0
    #allocation2 [shape = 'u8[49152]{0}', space=vmem, size = 0xc000, scoped, tag = 'input window, operand 0']
    #allocation3 [shape = 's32[2]{0}', space=sflag, size = 0x8, scoped, tag = 'scoped memory for tpu_custom_call.1']
    #allocation4 [shape = 's32[2]{0}', space=sflag, size = 0x8, scoped, tag = 'scoped memory for tpu_custom_call.1']
    #allocation5 [shape = 'u8[3072]{0}', space=vmem, size = 0xc00, scoped, tag = 'input window, operand 1, single buffered']
    #allocation6 [shape = 's32[1]{0}', space=sflag, size = 0x4, scoped, tag = 'scoped memory for tpu_custom_call.1']
    #allocation7 [shape = 'u8[24576]{0}', space=vmem, size = 0x6000, scoped, tag = 'output window, operand 0']
    %8 = vsyncpa [#allocation3], 0
    %s9 = scalar_lea.sflag [#allocation3], 1
    %10 = vsyncpa %s9, 0
    %11 = vsyncpa [#allocation6], 0
    %12 = vsyncpa [#allocation4], 0
    %s13 = scalar_lea.sflag [#allocation4], 1
    %14 = vsyncpa %s13, 0
    loop: start=0, step=1, limit=4
    $region2: #{tpu_custom_call.1} parent=1 // loop_pre_header
      _
    $region3: #{tpu_custom_call.1} parent=1 // loop_header
      %s16 = sphi 0, %s20
      %p17 = scmp.ge.s32.totalorder %s16, 4
      %s26 = sphi 0, %s28
      %s29 = sphi 0, %s26
      %s30 = sphi 0, %s29
      %s46 = sphi 0, %s30
      %s50 = sphi 0, %s50
      %s52 = sphi 0, %s50
      %s53 = sphi 0, %s52
      %s67 = sphi 0, %s53
      %s71 = sphi 0, %s71
      %s73 = sphi 0, %s71
      %s74 = sphi 0, %s73
      %s88 = sphi 0, %s74
      %s94 = sphi 0, %s96
      %s97 = sphi 0, %s94
      %s98 = sphi 0, %s97
      %s114 = sphi 0, %s98
    $region4: #{tpu_custom_call.1} parent=1 // loop_header_branch
      %19 = sbr.rel (%p17) target = $region8
    $region5: #{tpu_custom_call.1} parent=1 // loop_body
      %s21 = ssub.s32 %s16, 1
      %s22 = ssub.s32 %s16, 2
      %s23 = sadd.s32 %s16, 1
      %s24 = ssub.s32 %s16, %s23
      %p25 = scmp.eq.s32.totalorder %s24, 0
      %s27 = sadd.s32 %s26, 1
      %s28 = scalar_select %p25, %s26, %s27
      %p31 = pneg %p25
      %p32 = scmp.eq.s32.totalorder %s16, 1
      %p33 = por %p31, %p32
      %p34 = scmp.ne.s32.totalorder %s26, %s29
      %p35 = scmp.eq.s32.totalorder %s16, 0
      %p36 = por %p34, %p35
      %p37 = scmp.ne.s32.totalorder %s26, %s29
      %p38 = scmp.eq.s32.totalorder %s21, 1
      %p39 = por %p37, %p38
      %p40 = scmp.ne.s32.totalorder %s29, %s30
      %p41 = scmp.eq.s32.totalorder %s21, 0
      %p42 = por %p40, %p41
      %p43 = scmp.ne.s32.totalorder %s29, %s30
      %p44 = scmp.eq.s32.totalorder %s22, 1
      %p45 = por %p43, %p44
      %p47 = scmp.ne.s32.totalorder %s30, %s46
      %p48 = scmp.eq.s32.totalorder %s22, 0
      %p49 = por %p47, %p48
      %s51 = sadd.s32 %s50, 1
      %p54 = scmp.eq.s32.totalorder %s16, 1
      %p55 = scmp.ne.s32.totalorder %s50, %s52
      %p56 = scmp.eq.s32.totalorder %s16, 0
      %p57 = por %p55, %p56
      %p58 = scmp.ne.s32.totalorder %s50, %s52
      %p59 = scmp.eq.s32.totalorder %s21, 1
      %p60 = por %p58, %p59
      %p61 = scmp.ne.s32.totalorder %s52, %s53
      %p62 = scmp.eq.s32.totalorder %s21, 0
      %p63 = por %p61, %p62
      %p64 = scmp.ne.s32.totalorder %s52, %s53
      %p65 = scmp.eq.s32.totalorder %s22, 1
      %p66 = por %p64, %p65
      %p68 = scmp.ne.s32.totalorder %s53, %s67
      %p69 = scmp.eq.s32.totalorder %s22, 0
      %p70 = por %p68, %p69
      %s72 = sadd.s32 %s71, 1
      %p75 = scmp.eq.s32.totalorder %s16, 1
      %p76 = scmp.ne.s32.totalorder %s71, %s73
      %p77 = scmp.eq.s32.totalorder %s16, 0
      %p78 = por %p76, %p77
      %p79 = scmp.ne.s32.totalorder %s71, %s73
      %p80 = scmp.eq.s32.totalorder %s21, 1
      %p81 = por %p79, %p80
      %p82 = scmp.ne.s32.totalorder %s73, %s74
      %p83 = scmp.eq.s32.totalorder %s21, 0
      %p84 = por %p82, %p83
      %p85 = scmp.ne.s32.totalorder %s73, %s74
      %p86 = scmp.eq.s32.totalorder %s22, 1
      %p87 = por %p85, %p86
      %p89 = scmp.ne.s32.totalorder %s74, %s88
      %p90 = scmp.eq.s32.totalorder %s22, 0
      %p91 = por %p89, %p90
      %s92 = ssub.s32 %s16, %s23
      %p93 = scmp.eq.s32.totalorder %s92, 0
      %s95 = sadd.s32 %s94, 1
      %s96 = scalar_select %p93, %s94, %s95
      %p99 = pneg %p93
      %p100 = scmp.eq.s32.totalorder %s16, 1
      %p101 = por %p99, %p100
      %p102 = scmp.ne.s32.totalorder %s94, %s97
      %p103 = scmp.eq.s32.totalorder %s16, 0
      %p104 = por %p102, %p103
      %p105 = scmp.ne.s32.totalorder %s94, %s97
      %p106 = scmp.eq.s32.totalorder %s21, 1
      %p107 = por %p105, %p106
      %p108 = scmp.ne.s32.totalorder %s97, %s98
      %p109 = scmp.eq.s32.totalorder %s21, 0
      %p110 = por %p108, %p109
      %p111 = scmp.ne.s32.totalorder %s97, %s98
      %p112 = scmp.eq.s32.totalorder %s22, 1
      %p113 = por %p111, %p112
      %p115 = scmp.ne.s32.totalorder %s98, %s114
      %p116 = scmp.eq.s32.totalorder %s22, 0
      %p117 = por %p115, %p116
      %p118 = scmp.le.s32.totalorder 1, %s16
      %p119 = scmp.lt.s32.totalorder %s16, 3
      %p120 = pnand %p118, %p119
      %p121 = pneg %p120
      // Predicated region
      $region9: #{tpu_custom_call.1} parent=5 // pred_check
        _
      $region10: #{tpu_custom_call.1} parent=5 // pred_check_branch
        %123 = sbr.rel (%p120) target = $region12
      $region11: #{tpu_custom_call.1} parent=5 // pred_region
        %s124 = ssub.s32 %s16, 1
        // Predicated region
        $region13: #{tpu_custom_call.1} parent=11 // pred_check
          %p125 = pneg %p63
        $region14: #{tpu_custom_call.1} parent=11 // pred_check_branch
          %127 = sbr.rel (%p125) target = $region16
        $region15: #{tpu_custom_call.1} parent=11 // pred_region
          %s129 = ssub.s32 96, 96
          %130 = vsyncadd [#allocation6], %s129
          %s132 = sshll.u32 [#allocation5], 4
          %s133 = int_to_ptr.vmem [resolvable:$true] %s132
          %135 = dma.hbm_to_vmem [thread:$0]  %s1, 96, %s133, [#allocation6]
        $region16: #{tpu_custom_call.1} parent=11 // pred_fallthru
          _
        // Predicated region
        $region17: #{tpu_custom_call.1} parent=11 // pred_check
          %p136 = pneg %p84
        $region18: #{tpu_custom_call.1} parent=11 // pred_check_branch
          %138 = sbr.rel (%p136) target = $region20
        $region19: #{tpu_custom_call.1} parent=11 // pred_region
          _
        $region20: #{tpu_custom_call.1} parent=11 // pred_fallthru
          _
      $region12: #{tpu_custom_call.1} parent=5 // pred_fallthru
        _
      %p139 = scmp.lt.s32.totalorder %s16, 2
      // Predicated region
      $region21: #{tpu_custom_call.1} parent=5 // pred_check
        %p140 = pneg %p139
      $region22: #{tpu_custom_call.1} parent=5 // pred_check_branch
        %142 = sbr.rel (%p140) target = $region24
      $region23: #{tpu_custom_call.1} parent=5 // pred_region
        // Predicated region
        $region25: #{tpu_custom_call.1} parent=23 // pred_check
          %p143 = pneg %p36
        $region26: #{tpu_custom_call.1} parent=23 // pred_check_branch
          %145 = sbr.rel (%p143) target = $region28
        $region27: #{tpu_custom_call.1} parent=23 // pred_region
          %s146 = sand.u32 %s26, 1
          %s147 = scalar_lea.sflag [#allocation3], %s146
          %s148 = sand.u32 %s26, 1
          %s149 = smul.addr %s148, 48
          %s150 = scalar_lea.vmem [#allocation2], %s149
          %s152 = ssub.s32 768, 768
          %153 = vsyncadd %s147, %s152
          %s154 = smul.addr %s16, 6
          %s155 = smul.addr %s154, 128
          %s156 = scalar_lea.hbm %s0, %s155
          %s158 = sshll.u32 %s150, 4
          %s159 = int_to_ptr.vmem [resolvable:$true] %s158
          %161 = dma.hbm_to_vmem [thread:$0]  %s156, 768, %s159, %s147
        $region28: #{tpu_custom_call.1} parent=23 // pred_fallthru
          _
      $region24: #{tpu_custom_call.1} parent=5 // pred_fallthru
        _
      %p162 = scmp.le.s32.totalorder 1, %s16
      %p163 = scmp.lt.s32.totalorder %s16, 3
      %p164 = pnand %p162, %p163
      %p165 = pneg %p164
      // Predicated region
      $region29: #{tpu_custom_call.1} parent=5 // pred_check
        _
      $region30: #{tpu_custom_call.1} parent=5 // pred_check_branch
        %167 = sbr.rel (%p164) target = $region32
      $region31: #{tpu_custom_call.1} parent=5 // pred_region
        %s168 = ssub.s32 %s16, 1
        %s169 = sand.u32 %s29, 1
        %s170 = scalar_lea.sflag [#allocation3], %s169
        %s171 = sand.u32 %s29, 1
        %s172 = smul.addr %s171, 48
        %s173 = scalar_lea.vmem [#allocation2], %s172
        // Predicated region
        $region33: #{tpu_custom_call.1} parent=31 // pred_check
          %p174 = pneg %p42
        $region34: #{tpu_custom_call.1} parent=31 // pred_check_branch
          %176 = sbr.rel (%p174) target = $region36
        $region35: #{tpu_custom_call.1} parent=31 // pred_region
          %177 = dma.done %s170, 768
        $region36: #{tpu_custom_call.1} parent=31 // pred_fallthru
          _
        // Predicated region
        $region37: #{tpu_custom_call.1} parent=31 // pred_check
          %p178 = pneg %p63
        $region38: #{tpu_custom_call.1} parent=31 // pred_check_branch
          %180 = sbr.rel (%p178) target = $region40
        $region39: #{tpu_custom_call.1} parent=31 // pred_region
          %181 = dma.done [#allocation6], 96
        $region40: #{tpu_custom_call.1} parent=31 // pred_fallthru
          _
        %s182 = sand.u32 %s29, 1
        %s183 = scalar_lea.sflag [#allocation3], %s182
        %s184 = sand.u32 %s29, 1
        %s185 = smul.addr %s184, 48
        %s186 = scalar_lea.vmem [#allocation2], %s185
        %p187 = pneg %p42
        %p188 = pneg %p39
        %p189 = pneg %p63
        %p190 = pneg %p60
        %p191 = pneg %p84
        %p192 = pneg %p81
        %p193 = pneg %p110
        %p194 = pneg %p107
        %s195 = sand.u32 %s97, 1
        %s196 = scalar_lea.sflag [#allocation4], %s195
        %s197 = sand.u32 %s97, 1
        %s198 = smul.addr %s197, 24
        %s199 = scalar_lea.vmem [#allocation7], %s198
        %v200 = vld [vmem:[%s173] sm:$0xff]
        %v201 = vld [vmem:[%s173 + $0x8] sm:$0xff]
        %v202 = vld [vmem:[%s173 + $0x10] sm:$0xff]
        %v203 = vld [vmem:[%s173 + $0x18] sm:$0xff]
        %v204 = vld [vmem:[%s173 + $0x20] sm:$0xff]
        %v205 = vld [vmem:[%s173 + $0x28] sm:$0xff]
        %v206 = vadd.f32 %v200, %v201
        %v207 = vadd.f32 %v206, %v202
        %v208 = vadd.f32 %v207, %v203
        %v209 = vadd.f32 %v208, %v204
        %v210 = vadd.f32 %v209, %v205
        %211 = vadd.xlane.f32.xlu0 %v210
        %v212 = vpop.xlane.xlu0 %211
        %v213 = vrcp.pop 768.0
        %v214 = vmul.f32 %v212, %v213
        %v215 = vsub.f32 %v200, %v214
        %v216 = vsub.f32 %v201, %v214
        %v217 = vsub.f32 %v202, %v214
        %v218 = vsub.f32 %v203, %v214
        %v219 = vsub.f32 %v204, %v214
        %v220 = vsub.f32 %v205, %v214
        %v221 = vmul.f32 %v215, %v215
        %v222 = vmul.f32 %v216, %v216
        %v223 = vmul.f32 %v217, %v217
        %v224 = vmul.f32 %v218, %v218
        %v225 = vmul.f32 %v219, %v219
        %v226 = vmul.f32 %v220, %v220
        %v227 = vadd.f32 %v221, %v222
        %v228 = vadd.f32 %v227, %v223
        %v229 = vadd.f32 %v228, %v224
        %v230 = vadd.f32 %v229, %v225
        %v231 = vadd.f32 %v230, %v226
        %232 = vadd.xlane.f32.xlu0 %v231
        %v233 = vpop.xlane.xlu0 %232
        %v234 = vmul.f32 %v233, %v213
        %v235 = vadd.f32 %v234, 1e-12
        %v236 = vrsqrt.pop %v235
        %v237 = vmul.f32 %v215, %v236
        %v238 = vmul.f32 %v216, %v236
        %v239 = vmul.f32 %v217, %v236
        %v240 = vmul.f32 %v218, %v236
        %v241 = vmul.f32 %v219, %v236
        %v242 = vmul.f32 %v220, %v236
        %v243 = vld [vmem:[#allocation5] sm:$0x3f]
        %v245 = vlaneseq
        %v246 = vshrl.u32 %v245, 7
        %v247 = vsub.s32 0, %v246
        %v248 = vrot.slane %v243, %v247
        %v249 = vlaneseq
        %v250 = vshrl.u32 %v249, 7
        %v251 = vsub.s32 1, %v250
        %v252 = vrot.slane %v243, %v251
        %v253 = vlaneseq
        %v254 = vshrl.u32 %v253, 7
        %v255 = vsub.s32 2, %v254
        %v256 = vrot.slane %v243, %v255
        %v257 = vlaneseq
        %v258 = vshrl.u32 %v257, 7
        %v259 = vsub.s32 3, %v258
        %v260 = vrot.slane %v243, %v259
        %v261 = vlaneseq
        %v262 = vshrl.u32 %v261, 7
        %v263 = vsub.s32 4, %v262
        %v264 = vrot.slane %v243, %v263
        %v265 = vlaneseq
        %v266 = vshrl.u32 %v265, 7
        %v267 = vsub.s32 5, %v266
        %v268 = vrot.slane %v243, %v267
        %v275 = vmul.f32 %v237, %v248
        %v276 = vmul.f32 %v238, %v252
        %v277 = vmul.f32 %v239, %v256
        %v278 = vmul.f32 %v240, %v260
        %v279 = vmul.f32 %v241, %v264
        %v280 = vmul.f32 %v242, %v268
        %v281 = vld [vmem:[%s2] sm:$0x3f]
        %v283 = vlaneseq
        %v284 = vshrl.u32 %v283, 7
        %v285 = vsub.s32 0, %v284
        %v286 = vrot.slane %v281, %v285
        %v287 = vlaneseq
        %v288 = vshrl.u32 %v287, 7
        %v289 = vsub.s32 1, %v288
        %v290 = vrot.slane %v281, %v289
        %v291 = vlaneseq
        %v292 = vshrl.u32 %v291, 7
        %v293 = vsub.s32 2, %v292
        %v294 = vrot.slane %v281, %v293
        %v295 = vlaneseq
        %v296 = vshrl.u32 %v295, 7
        %v297 = vsub.s32 3, %v296
        %v298 = vrot.slane %v281, %v297
        %v299 = vlaneseq
        %v300 = vshrl.u32 %v299, 7
        %v301 = vsub.s32 4, %v300
        %v302 = vrot.slane %v281, %v301
        %v303 = vlaneseq
        %v304 = vshrl.u32 %v303, 7
        %v305 = vsub.s32 5, %v304
        %v306 = vrot.slane %v281, %v305
        %v313 = vadd.f32 %v275, %v286
        %v314 = vadd.f32 %v276, %v290
        %v315 = vadd.f32 %v277, %v294
        %v316 = vadd.f32 %v278, %v298
        %v317 = vadd.f32 %v279, %v302
        %v318 = vadd.f32 %v280, %v306
        %v319 = vpack.c.bf16 %v313, %v313
        %v320 = vpack.c.bf16 %v314, %v314
        %v321 = vpack.c.bf16 %v315, %v315
        %v322 = vpack.c.bf16 %v316, %v316
        %v323 = vpack.c.bf16 %v317, %v317
        %v324 = vpack.c.bf16 %v318, %v318
        %v331 = vunpack.c.l.b16 %v319
        %v332 = vunpack.c.l.b16 %v320
        %v333 = vunpack.c.l.b16 %v321
        %v334 = vunpack.c.l.b16 %v322
        %v335 = vunpack.c.l.b16 %v323
        %v336 = vunpack.c.l.b16 %v324
        %v337 = vpack.c.b16 %v332, %v331
        %v338 = vpack.c.b16 %v334, %v333
        %v339 = vpack.c.b16 %v336, %v335
        %343 = vst [vmem:[%s199] sm:$0xff] %v337
        %344 = vst [vmem:[%s199 + $0x8] sm:$0xff] %v338
        %345 = vst [vmem:[%s199 + $0x10] sm:$0xff] %v339
        %s346 = sand.u32 %s97, 1
        %s347 = scalar_lea.sflag [#allocation4], %s346
        %s348 = sand.u32 %s97, 1
        %s349 = smul.addr %s348, 24
        %s350 = scalar_lea.vmem [#allocation7], %s349
        // Predicated region
        $region41: #{tpu_custom_call.1} parent=31 // pred_check
          %p351 = pneg %p107
        $region42: #{tpu_custom_call.1} parent=31 // pred_check_branch
          %353 = sbr.rel (%p351) target = $region44
        $region43: #{tpu_custom_call.1} parent=31 // pred_region
          %s355 = ssub.s32 384, 384
          %356 = vsyncadd %s347, %s355
          %s357 = smul.addr %s21, 6
          %s358 = smul.addr %s357, 64
          %s359 = scalar_lea.hbm %s3, %s358
          %s361 = sshll.u32 %s350, 4
          %s362 = int_to_ptr.vmem [resolvable:$true] %s361
          %364 = dma.vmem_to_hbm [thread:$0]  %s362, 384, %s359, %s347
        $region44: #{tpu_custom_call.1} parent=31 // pred_fallthru
          _
      $region32: #{tpu_custom_call.1} parent=5 // pred_fallthru
        _
      %p365 = scmp.le.s32.totalorder 2, %s16
      // Predicated region
      $region45: #{tpu_custom_call.1} parent=5 // pred_check
        %p366 = pneg %p365
      $region46: #{tpu_custom_call.1} parent=5 // pred_check_branch
        %368 = sbr.rel (%p366) target = $region48
      $region47: #{tpu_custom_call.1} parent=5 // pred_region
        %s369 = ssub.s32 %s16, 2
        // Predicated region
        $region49: #{tpu_custom_call.1} parent=47 // pred_check
          %p370 = pneg %p113
        $region50: #{tpu_custom_call.1} parent=47 // pred_check_branch
          %372 = sbr.rel (%p370) target = $region52
        $region51: #{tpu_custom_call.1} parent=47 // pred_region
          %s373 = sand.u32 %s98, 1
          %s374 = scalar_lea.sflag [#allocation4], %s373
          %s375 = sand.u32 %s98, 1
          %s376 = smul.addr %s375, 24
          %s377 = scalar_lea.vmem [#allocation7], %s376
          %378 = dma.done %s374, 384
        $region52: #{tpu_custom_call.1} parent=47 // pred_fallthru
          _
      $region48: #{tpu_custom_call.1} parent=5 // pred_fallthru
        _
    $region6: #{tpu_custom_call.1} parent=1 // loop_footer
      %s20 = sadd.s32 1, %s16
    $region7: #{tpu_custom_call.1} parent=1 // loop_footer_branch
      %15 = sbr.rel target = $region3
    $region8: #{tpu_custom_call.1} parent=1 // loop_exit
      _
    %379 = vsyncpa [#allocation3], 1
    %s380 = scalar_lea.sflag [#allocation3], 1
    %381 = vsyncpa %s380, 1
    %382 = vsyncpa [#allocation6], 1
    %383 = vsyncpa [#allocation4], 1
    %s384 = scalar_lea.sflag [#allocation4], 1
    %385 = vsyncpa %s384, 1

</llo_original>
